<compile_context>
chip_gen: v7x
topology: tpu7x:2x2x1
jax: 0.10.0
libtpu: 0.0.40
codegen_flags: <defaults>
</compile_context>

<pallas_src>
import jax
import jax.numpy as jnp
from jax import lax
from jax.experimental import pallas as pl
from jax.experimental.pallas import tpu as pltpu


def mlp_kernel(x_ref,
               w1_ref, b1_ref,
               w2_ref, b2_ref,
               w3_ref, b3_ref,
               w4_ref, b4_ref,
               o_ref):
    # x_ref: (bm, F).  All activations below are transposed: (out_dim, bm).
    # Layer 1: h1^T = relu(W1 @ x^T + b1) -- transpose-RHS matmul, contracts the
    # minor (feature) dim of both operands, so no explicit transpose of x is needed.
    h = lax.dot_general(
        w1_ref[...], x_ref[...],
        dimension_numbers=(((1,), (1,)), ((), ())),
        preferred_element_type=jnp.float32)                      # (128, bm) f32
    h = jnp.maximum(h + b1_ref[...], 0.0)
    # Dropout(0.3): identity at inference.

    # Layer 2: canonical MXU matmul.
    h = jnp.dot(w2_ref[...], h, preferred_element_type=jnp.float32)  # (64, bm)
    h = jnp.maximum(h + b2_ref[...], 0.0)
    # Dropout(0.2): identity at inference.

    # Layer 3.
    h = jnp.dot(w3_ref[...], h, preferred_element_type=jnp.float32)  # (32, bm)
    h = jnp.maximum(h + b3_ref[...], 0.0)

    # Layer 4 (out_dim = 1): VPU multiply + cross-sublane reduce instead of an
    # N=1 MXU matmul (MXU is not the bottleneck; XLU slot is idle).
    out_row = jnp.sum(h * w4_ref[...], axis=0, keepdims=True) + b4_ref[...]  # (1, bm)
    o_ref[...] = out_row.reshape(o_ref.shape).astype(o_ref.dtype)


def _round_up(n, m):
    return (n + m - 1) // m * m


def house_price_model(x, params, *, block_m=512, input_dtype=None):
    """Fused MLP forward.  x: (B, input_size) float32.  Returns (B, 1) float32.

    params: [(W1, b1), ..., (W4, b4)] in PyTorch nn.Linear layout:
            W_l of shape (out_features, in_features), b_l of shape (out_features,).
    input_dtype: e.g. jnp.bfloat16 to halve HBM read traffic on x (v6e/v7x).
    """
    (w1, b1), (w2, b2), (w3, b3), (w4, b4) = params
    B, F = x.shape

    # Layout plumbing (tiny, done once in the wrapper):
    # biases as (out, 1) columns for the transposed-activation kernel,
    # W4 as a (32, 1) column for the VPU/XLU final layer, b4 as (1, 1).
    b1c = b1.reshape(-1, 1).astype(jnp.float32)
    b2c = b2.reshape(-1, 1).astype(jnp.float32)
    b3c = b3.reshape(-1, 1).astype(jnp.float32)
    w4c = w4.reshape(1, -1).T.astype(jnp.float32)
    b4c = b4.reshape(1, 1).astype(jnp.float32)
    w2c = w2.astype(jnp.float32)
    w3c = w3.astype(jnp.float32)

    # Optionally cast the HBM-dominant operands (x and W1) to bf16; the remaining
    # weights (~42 KB, grid-invariant) stay f32, as do all accumulations / VPU ops.
    if input_dtype is not None:
        x = x.astype(input_dtype)
        w1c = w1.astype(input_dtype)
    else:
        w1c = w1.astype(jnp.float32)

    # ---- choose the batch tile -------------------------------------------------
    block_m = max(8, _round_up(block_m, 8))
    bm = min(block_m, _round_up(B, 8))
    # Prefer >= 2 "parallel" grid steps so v7x's second TensorCore gets work.
    if B > 8 and pl.cdiv(B, bm) < 2:
        bm = _round_up(pl.cdiv(bm, 2), 8)
    Bp = _round_up(B, bm)
    if Bp != B:
        x = jnp.pad(x, ((0, Bp - B), (0, 0)))   # zero-pad the tail tile (no OOB reads)
    n_blocks = Bp // bm

    const2 = lambda i: (0, 0)
    in_specs = [
        pl.BlockSpec((bm, F), lambda i: (i, 0)),            # x tile
        pl.BlockSpec(w1c.shape, const2), pl.BlockSpec(b1c.shape, const2),
        pl.BlockSpec(w2c.shape, const2), pl.BlockSpec(b2c.shape, const2),
        pl.BlockSpec(w3c.shape, const2), pl.BlockSpec(b3c.shape, const2),
        pl.BlockSpec(w4c.shape, const2), pl.BlockSpec(b4c.shape, const2),
    ]
    # Lane-dense output: each grid step writes one (1, 1, bm) row.
    out_specs = pl.BlockSpec((1, 1, bm), lambda i: (i, 0, 0))

    flops = 2 * Bp * (w1c.size + w2c.size + w3c.size + w4c.size)
    bytes_accessed = int(
        x.size * x.dtype.itemsize
        + sum(a.size * a.dtype.itemsize
              for a in (w1c, b1c, w2c, b2c, w3c, b3c, w4c, b4c))
        + Bp * 4)
    cost = pl.CostEstimate(flops=flops, transcendentals=0,
                           bytes_accessed=bytes_accessed)

    out = pl.pallas_call(
        mlp_kernel,
        out_shape=jax.ShapeDtypeStruct((n_blocks, 1, bm), jnp.float32),
        grid=(n_blocks,),
        in_specs=in_specs,
        out_specs=out_specs,
        compiler_params=pltpu.CompilerParams(
            dimension_semantics=("parallel",)),
        cost_estimate=cost,
    )(x, w1c, b1c, w2c, b2c, w3c, b3c, w4c, b4c)

    # (n_blocks, 1, bm) row-major == batch order; undo padding.
    return out.reshape(Bp, 1)[:B]


def init_params(key, input_size):
    """PyTorch-default-style init; weights in nn.Linear layout (out, in)."""
    dims = [input_size, 128, 64, 32, 1]
    params = []
    for i in range(4):
        key, kw, kb = jax.random.split(key, 3)
        fan_in = dims[i]
        bound = 1.0 / jnp.sqrt(fan_in)
        w = jax.random.uniform(kw, (dims[i + 1], dims[i]),
                               minval=-bound, maxval=bound, dtype=jnp.float32)
        b = jax.random.uniform(kb, (dims[i + 1],),
                               minval=-bound, maxval=bound, dtype=jnp.float32)
        params.append((w, b))
    return params


def reference_forward(x, params):
    """Pure-JAX reference of the PyTorch forward (eval mode)."""
    (w1, b1), (w2, b2), (w3, b3), (w4, b4) = params
    h = jnp.maximum(x @ w1.T + b1, 0.0)
    h = jnp.maximum(h @ w2.T + b2, 0.0)
    h = jnp.maximum(h @ w3.T + b3, 0.0)
    return h @ w4.T + b4


if __name__ == "__main__":
    key = jax.random.PRNGKey(0)
    input_size = 16    # number of house features
    batch = 256        # small, but enough for >= 2 parallel grid steps

    key, kx, kp = jax.random.split(key, 3)
    x = jax.random.normal(kx, (batch, input_size), dtype=jnp.float32)
    params = init_params(kp, input_size)

    ref = reference_forward(x, params)

    # f32 path: must match the reference tightly.
    out = jax.block_until_ready(house_price_model(x, params))
    assert out.shape == (batch, 1)
    assert jnp.allclose(out, ref, atol=1e-5, rtol=1e-5), "f32 mismatch vs reference"

    # bf16 input path (v6e/v7x HBM-traffic halving): loose tolerance.
    out_bf = jax.block_until_ready(
        house_price_model(x, params, input_dtype=jnp.bfloat16))
    assert out_bf.shape == (batch, 1)
    assert jnp.allclose(out_bf, ref, atol=5e-2, rtol=5e-2), "bf16 mismatch vs reference"

    # Ragged batch (not a multiple of the tile) exercises the zero-padding path.
    out_tail = jax.block_until_ready(house_price_model(x[:100], params))
    assert out_tail.shape == (100, 1)
    assert jnp.allclose(out_tail, ref[:100], atol=1e-5, rtol=1e-5), "tail mismatch"

    print("KERNEL_OK")
</pallas_src>

<mosaic_0001>
module attributes {stable_mosaic.version = 11 : i64} {
  func.func @mlp_kernel(%arg0: i32, %arg1: memref<128x16xf32, #tpu.memory_space<vmem>>, %arg2: memref<128x16xf32, #tpu.memory_space<vmem>>, %arg3: memref<128x1xf32, #tpu.memory_space<vmem>>, %arg4: memref<64x128xf32, #tpu.memory_space<vmem>>, %arg5: memref<64x1xf32, #tpu.memory_space<vmem>>, %arg6: memref<32x64xf32, #tpu.memory_space<vmem>>, %arg7: memref<32x1xf32, #tpu.memory_space<vmem>>, %arg8: memref<32x1xf32, #tpu.memory_space<vmem>>, %arg9: memref<1x1xf32, #tpu.memory_space<vmem>>, %arg10: memref<1x1x128xf32, #tpu.memory_space<vmem>>) attributes {dimension_semantics = [#tpu.dimension_semantics<parallel>], iteration_bounds = array<i64: 2>, scalar_prefetch = 0 : i64, scratch_operands = 0 : i64, tpu.core_type = #tpu.core_type<tc>, window_params = [{transform_indices = @transform_0, window_bounds = array<i64: 128, 16>}, {pipeline_mode = #tpu.pipeline_mode<synchronous>, transform_indices = @transform_1, window_bounds = array<i64: 128, 16>}, {pipeline_mode = #tpu.pipeline_mode<synchronous>, transform_indices = @transform_2, window_bounds = array<i64: 128, 1>}, {pipeline_mode = #tpu.pipeline_mode<synchronous>, transform_indices = @transform_3, window_bounds = array<i64: 64, 128>}, {pipeline_mode = #tpu.pipeline_mode<synchronous>, transform_indices = @transform_4, window_bounds = array<i64: 64, 1>}, {pipeline_mode = #tpu.pipeline_mode<synchronous>, transform_indices = @transform_5, window_bounds = array<i64: 32, 64>}, {pipeline_mode = #tpu.pipeline_mode<synchronous>, transform_indices = @transform_6, window_bounds = array<i64: 32, 1>}, {pipeline_mode = #tpu.pipeline_mode<synchronous>, transform_indices = @transform_7, window_bounds = array<i64: 32, 1>}, {pipeline_mode = #tpu.pipeline_mode<synchronous>, transform_indices = @transform_8, window_bounds = array<i64: 1, 1>}, {transform_indices = @transform_9, window_bounds = array<i64: 1, 1, 128>}]} {
    %c0 = arith.constant 0 : index
    %c0_0 = arith.constant 0 : index
    %0 = vector.load %arg2[%c0, %c0_0] : memref<128x16xf32, #tpu.memory_space<vmem>>, vector<128x16xf32>
    %c0_1 = arith.constant 0 : index
    %c0_2 = arith.constant 0 : index
    %1 = vector.load %arg1[%c0_1, %c0_2] : memref<128x16xf32, #tpu.memory_space<vmem>>, vector<128x16xf32>
    %cst = arith.constant dense<0.000000e+00> : vector<128x128xf32>
    %2 = tpu.matmul %0, %1, %cst {dimension_numbers = #tpu.dot_dimension_numbers<[1], [1], [0], [0], [0, 0, 1, 0], [], []>} : vector<128x16xf32>, vector<128x16xf32>, vector<128x128xf32> -> vector<128x128xf32>
    %c0_3 = arith.constant 0 : index
    %c0_4 = arith.constant 0 : index
    %3 = vector.load %arg3[%c0_3, %c0_4] : memref<128x1xf32, #tpu.memory_space<vmem>>, vector<128x1xf32>
    %4 = vector.broadcast %3 : vector<128x1xf32> to vector<128x128xf32>
    %5 = arith.addf %2, %4 : vector<128x128xf32>
    %cst_5 = arith.constant 0.000000e+00 : f32
    %6 = vector.broadcast %cst_5 : f32 to vector<128x128xf32>
    %7 = arith.maximumf %5, %6 : vector<128x128xf32>
    %c0_6 = arith.constant 0 : index
    %c0_7 = arith.constant 0 : index
    %8 = vector.load %arg4[%c0_6, %c0_7] : memref<64x128xf32, #tpu.memory_space<vmem>>, vector<64x128xf32>
    %cst_8 = arith.constant dense<0.000000e+00> : vector<64x128xf32>
    %9 = tpu.matmul %8, %7, %cst_8 {dimension_numbers = #tpu.dot_dimension_numbers<[1], [0], [0], [1], [0, 0, 1, 1], [], []>} : vector<64x128xf32>, vector<128x128xf32>, vector<64x128xf32> -> vector<64x128xf32>
    %c0_9 = arith.constant 0 : index
    %c0_10 = arith.constant 0 : index
    %10 = vector.load %arg5[%c0_9, %c0_10] : memref<64x1xf32, #tpu.memory_space<vmem>>, vector<64x1xf32>
    %11 = vector.broadcast %10 : vector<64x1xf32> to vector<64x128xf32>
    %12 = arith.addf %9, %11 : vector<64x128xf32>
    %cst_11 = arith.constant 0.000000e+00 : f32
    %13 = vector.broadcast %cst_11 : f32 to vector<64x128xf32>
    %14 = arith.maximumf %12, %13 : vector<64x128xf32>
    %c0_12 = arith.constant 0 : index
    %c0_13 = arith.constant 0 : index
    %15 = vector.load %arg6[%c0_12, %c0_13] : memref<32x64xf32, #tpu.memory_space<vmem>>, vector<32x64xf32>
    %cst_14 = arith.constant dense<0.000000e+00> : vector<32x128xf32>
    %16 = tpu.matmul %15, %14, %cst_14 {dimension_numbers = #tpu.dot_dimension_numbers<[1], [0], [0], [1], [0, 0, 1, 1], [], []>} : vector<32x64xf32>, vector<64x128xf32>, vector<32x128xf32> -> vector<32x128xf32>
    %c0_15 = arith.constant 0 : index
    %c0_16 = arith.constant 0 : index
    %17 = vector.load %arg7[%c0_15, %c0_16] : memref<32x1xf32, #tpu.memory_space<vmem>>, vector<32x1xf32>
    %18 = vector.broadcast %17 : vector<32x1xf32> to vector<32x128xf32>
    %19 = arith.addf %16, %18 : vector<32x128xf32>
    %cst_17 = arith.constant 0.000000e+00 : f32
    %20 = vector.broadcast %cst_17 : f32 to vector<32x128xf32>
    %21 = arith.maximumf %19, %20 : vector<32x128xf32>
    %c0_18 = arith.constant 0 : index
    %c0_19 = arith.constant 0 : index
    %22 = vector.load %arg8[%c0_18, %c0_19] : memref<32x1xf32, #tpu.memory_space<vmem>>, vector<32x1xf32>
    %23 = vector.broadcast %22 : vector<32x1xf32> to vector<32x128xf32>
    %24 = arith.mulf %21, %23 : vector<32x128xf32>
    %cst_20 = arith.constant dense<0.000000e+00> : vector<128xf32>
    %25 = vector.multi_reduction <add>, %24, %cst_20 [0] : vector<32x128xf32> to vector<128xf32>
    %26 = vector.shape_cast %25 : vector<128xf32> to vector<1x128xf32>
    %c0_21 = arith.constant 0 : index
    %c0_22 = arith.constant 0 : index
    %27 = vector.load %arg9[%c0_21, %c0_22] : memref<1x1xf32, #tpu.memory_space<vmem>>, vector<1x1xf32>
    %28 = vector.broadcast %27 : vector<1x1xf32> to vector<1x128xf32>
    %29 = arith.addf %26, %28 : vector<1x128xf32>
    %30 = vector.shape_cast %29 : vector<1x128xf32> to vector<1x1x128xf32>
    %c0_23 = arith.constant 0 : index
    %c0_24 = arith.constant 0 : index
    %c0_25 = arith.constant 0 : index
    %31 = vector.load %arg10[%c0_23, %c0_24, %c0_25] : memref<1x1x128xf32, #tpu.memory_space<vmem>>, vector<1x1x128xf32>
    tpu.vector_store %arg10[%c0_23, %c0_24, %c0_25], %30 {strides = array<i32>} : memref<1x1x128xf32, #tpu.memory_space<vmem>>, vector<1x1x128xf32>,
    return
  }
  func.func @transform_0(%arg0: i32) -> (i32, i32) {
    %c0_i32 = arith.constant 0 : i32
    %c0_i32_0 = arith.constant 0 : i32
    return %arg0, %c0_i32 : i32, i32
  }
  func.func @transform_1(%arg0: i32) -> (i32, i32) {
    %c0_i32 = arith.constant 0 : i32
    %c0_i32_0 = arith.constant 0 : i32
    %c0_i32_1 = arith.constant 0 : i32
    return %c0_i32, %c0_i32_0 : i32, i32
  }
  func.func @transform_2(%arg0: i32) -> (i32, i32) {
    %c0_i32 = arith.constant 0 : i32
    %c0_i32_0 = arith.constant 0 : i32
    %c0_i32_1 = arith.constant 0 : i32
    return %c0_i32, %c0_i32_0 : i32, i32
  }
  func.func @transform_3(%arg0: i32) -> (i32, i32) {
    %c0_i32 = arith.constant 0 : i32
    %c0_i32_0 = arith.constant 0 : i32
    %c0_i32_1 = arith.constant 0 : i32
    return %c0_i32, %c0_i32_0 : i32, i32
  }
  func.func @transform_4(%arg0: i32) -> (i32, i32) {
    %c0_i32 = arith.constant 0 : i32
    %c0_i32_0 = arith.constant 0 : i32
    %c0_i32_1 = arith.constant 0 : i32
    return %c0_i32, %c0_i32_0 : i32, i32
  }
  func.func @transform_5(%arg0: i32) -> (i32, i32) {
    %c0_i32 = arith.constant 0 : i32
    %c0_i32_0 = arith.constant 0 : i32
    %c0_i32_1 = arith.constant 0 : i32
    return %c0_i32, %c0_i32_0 : i32, i32
  }
  func.func @transform_6(%arg0: i32) -> (i32, i32) {
    %c0_i32 = arith.constant 0 : i32
    %c0_i32_0 = arith.constant 0 : i32
    %c0_i32_1 = arith.constant 0 : i32
    return %c0_i32, %c0_i32_0 : i32, i32
  }
  func.func @transform_7(%arg0: i32) -> (i32, i32) {
    %c0_i32 = arith.constant 0 : i32
    %c0_i32_0 = arith.constant 0 : i32
    %c0_i32_1 = arith.constant 0 : i32
    return %c0_i32, %c0_i32_0 : i32, i32
  }
  func.func @transform_8(%arg0: i32) -> (i32, i32) {
    %c0_i32 = arith.constant 0 : i32
    %c0_i32_0 = arith.constant 0 : i32
    %c0_i32_1 = arith.constant 0 : i32
    return %c0_i32, %c0_i32_0 : i32, i32
  }
  func.func @transform_9(%arg0: i32) -> (i32, i32, i32) {
    %c0_i32 = arith.constant 0 : i32
    %c0_i32_0 = arith.constant 0 : i32
    %c0_i32_1 = arith.constant 0 : i32
    return %arg0, %c0_i32, %c0_i32_0 : i32, i32, i32
  }
}

</mosaic_0001>

<llo_original>
// kernel: tpu_custom_call.1
$region0: #{tpu_custom_call.1}
  #allocation0 [shape = 'u32[]', space=smem, size = 0x4, offset = 0x4, fixed_abs, tag = 'smem constant byte address 0x4 - core index']
  #allocation1 [shape = 'u32[144,128]{1,0:T(1,128)}', space=vmem, size = 0x12000, scoped, tag = 'internal scratch']
  #allocation2 [shape = 'f32[1,1]{1,0:T(1,128)S(1)}', space=vmem, size = 0x200, scoped, tag = 'scoped memory for tpu_custom_call.1']
  %s0 = inlined_call_operand.vmem [shape: f32[256,16], index: 0, kind: input, shape index: {}]
  %s1 = inlined_call_operand.vmem [shape: f32[128,16], index: 1, kind: input, shape index: {}]
  %s2 = inlined_call_operand.vmem [shape: f32[128,1], index: 2, kind: input, shape index: {}]
  %s3 = inlined_call_operand.vmem [shape: f32[64,128], index: 3, kind: input, shape index: {}]
  %s4 = inlined_call_operand.vmem [shape: f32[64,1], index: 4, kind: input, shape index: {}]
  %s5 = inlined_call_operand.vmem [shape: f32[32,64], index: 5, kind: input, shape index: {}]
  %s6 = inlined_call_operand.vmem [shape: f32[32,1], index: 6, kind: input, shape index: {}]
  %s7 = inlined_call_operand.vmem [shape: f32[32,1], index: 7, kind: input, shape index: {}]
  %s8 = inlined_call_operand.<no memory space> [shape: f32[1,1], index: 8, kind: input, shape index: {}]
  %s9 = inlined_call_operand.hbm [shape: f32[2,1,128], index: 9, kind: output, shape index: {}]
  %s10 = sld [smem:[#allocation0]]
  $region69: #{tpu_custom_call.1} parent=0
    _
  %s12 = ssub.s32 1, %s10
  %s13 = scalar_select 0, %s12, %s10
  %v14 = vstv %s8
  %15 = vst [vmem:[#allocation2] sm:$0x1] %v14
  $region1: #{tpu_custom_call.1} parent=0
    #allocation3 [shape = 'u8[1024]{0}', space=vmem, size = 0x400, scoped, tag = 'output window, operand 0']
    #allocation4 [shape = 's32[2]{0}', space=sflag, size = 0x8, scoped, tag = 'scoped memory for tpu_custom_call.1']
    %16 = vsyncpa [#allocation4], 0
    %s17 = scalar_lea.sflag [#allocation4], 1
    %18 = vsyncpa %s17, 0
    loop: start=0, step=1, limit=4
    $region2: #{tpu_custom_call.1} parent=1 // loop_pre_header
      _
    $region3: #{tpu_custom_call.1} parent=1 // loop_header
      %s20 = sphi 0, %s24
      %p21 = scmp.ge.s32.totalorder %s20, 4
      %s30 = sphi 0, %s32
      %s33 = sphi 0, %s30
      %s34 = sphi 0, %s33
      %s50 = sphi 0, %s34
      %s54 = sphi 0, %s54
      %s56 = sphi 0, %s54
      %s57 = sphi 0, %s56
      %s71 = sphi 0, %s57
      %s75 = sphi 0, %s75
      %s77 = sphi 0, %s75
      %s78 = sphi 0, %s77
      %s92 = sphi 0, %s78
      %s96 = sphi 0, %s96
      %s98 = sphi 0, %s96
      %s99 = sphi 0, %s98
      %s113 = sphi 0, %s99
      %s117 = sphi 0, %s117
      %s119 = sphi 0, %s117
      %s120 = sphi 0, %s119
      %s134 = sphi 0, %s120
      %s138 = sphi 0, %s138
      %s140 = sphi 0, %s138
      %s141 = sphi 0, %s140
      %s155 = sphi 0, %s141
      %s159 = sphi 0, %s159
      %s161 = sphi 0, %s159
      %s162 = sphi 0, %s161
      %s176 = sphi 0, %s162
      %s180 = sphi 0, %s180
      %s182 = sphi 0, %s180
      %s183 = sphi 0, %s182
      %s197 = sphi 0, %s183
      %s201 = sphi 0, %s201
      %s203 = sphi 0, %s201
      %s204 = sphi 0, %s203
      %s218 = sphi 0, %s204
      %s224 = sphi 0, %s226
      %s227 = sphi 0, %s224
      %s228 = sphi 0, %s227
      %s244 = sphi 0, %s228
    $region4: #{tpu_custom_call.1} parent=1 // loop_header_branch
      %23 = sbr.rel (%p21) target = $region8
    $region5: #{tpu_custom_call.1} parent=1 // loop_body
      %s25 = ssub.s32 %s20, 1
      %s26 = ssub.s32 %s20, 2
      %s27 = sadd.s32 %s20, 1
      %s28 = ssub.s32 %s20, %s27
      %p29 = scmp.eq.s32.totalorder %s28, 0
      %s31 = sadd.s32 %s30, 1
      %s32 = scalar_select %p29, %s30, %s31
      %p35 = pneg %p29
      %p36 = scmp.eq.s32.totalorder %s20, 1
      %p37 = por %p35, %p36
      %p38 = scmp.ne.s32.totalorder %s30, %s33
      %p39 = scmp.eq.s32.totalorder %s20, 0
      %p40 = por %p38, %p39
      %p41 = scmp.ne.s32.totalorder %s30, %s33
      %p42 = scmp.eq.s32.totalorder %s25, 1
      %p43 = por %p41, %p42
      %p44 = scmp.ne.s32.totalorder %s33, %s34
      %p45 = scmp.eq.s32.totalorder %s25, 0
      %p46 = por %p44, %p45
      %p47 = scmp.ne.s32.totalorder %s33, %s34
      %p48 = scmp.eq.s32.totalorder %s26, 1
      %p49 = por %p47, %p48
      %p51 = scmp.ne.s32.totalorder %s34, %s50
      %p52 = scmp.eq.s32.totalorder %s26, 0
      %p53 = por %p51, %p52
      %s55 = sadd.s32 %s54, 1
      %p58 = scmp.eq.s32.totalorder %s20, 1
      %p59 = scmp.ne.s32.totalorder %s54, %s56
      %p60 = scmp.eq.s32.totalorder %s20, 0
      %p61 = por %p59, %p60
      %p62 = scmp.ne.s32.totalorder %s54, %s56
      %p63 = scmp.eq.s32.totalorder %s25, 1
      %p64 = por %p62, %p63
      %p65 = scmp.ne.s32.totalorder %s56, %s57
      %p66 = scmp.eq.s32.totalorder %s25, 0
      %p67 = por %p65, %p66
      %p68 = scmp.ne.s32.totalorder %s56, %s57
      %p69 = scmp.eq.s32.totalorder %s26, 1
      %p70 = por %p68, %p69
      %p72 = scmp.ne.s32.totalorder %s57, %s71
      %p73 = scmp.eq.s32.totalorder %s26, 0
      %p74 = por %p72, %p73
      %s76 = sadd.s32 %s75, 1
      %p79 = scmp.eq.s32.totalorder %s20, 1
      %p80 = scmp.ne.s32.totalorder %s75, %s77
      %p81 = scmp.eq.s32.totalorder %s20, 0
      %p82 = por %p80, %p81
      %p83 = scmp.ne.s32.totalorder %s75, %s77
      %p84 = scmp.eq.s32.totalorder %s25, 1
      %p85 = por %p83, %p84
      %p86 = scmp.ne.s32.totalorder %s77, %s78
      %p87 = scmp.eq.s32.totalorder %s25, 0
      %p88 = por %p86, %p87
      %p89 = scmp.ne.s32.totalorder %s77, %s78
      %p90 = scmp.eq.s32.totalorder %s26, 1
      %p91 = por %p89, %p90
      %p93 = scmp.ne.s32.totalorder %s78, %s92
      %p94 = scmp.eq.s32.totalorder %s26, 0
      %p95 = por %p93, %p94
      %s97 = sadd.s32 %s96, 1
      %p100 = scmp.eq.s32.totalorder %s20, 1
      %p101 = scmp.ne.s32.totalorder %s96, %s98
      %p102 = scmp.eq.s32.totalorder %s20, 0
      %p103 = por %p101, %p102
      %p104 = scmp.ne.s32.totalorder %s96, %s98
      %p105 = scmp.eq.s32.totalorder %s25, 1
      %p106 = por %p104, %p105
      %p107 = scmp.ne.s32.totalorder %s98, %s99
      %p108 = scmp.eq.s32.totalorder %s25, 0
      %p109 = por %p107, %p108
      %p110 = scmp.ne.s32.totalorder %s98, %s99
      %p111 = scmp.eq.s32.totalorder %s26, 1
      %p112 = por %p110, %p111
      %p114 = scmp.ne.s32.totalorder %s99, %s113
      %p115 = scmp.eq.s32.totalorder %s26, 0
      %p116 = por %p114, %p115
      %s118 = sadd.s32 %s117, 1
      %p121 = scmp.eq.s32.totalorder %s20, 1
      %p122 = scmp.ne.s32.totalorder %s117, %s119
      %p123 = scmp.eq.s32.totalorder %s20, 0
      %p124 = por %p122, %p123
      %p125 = scmp.ne.s32.totalorder %s117, %s119
      %p126 = scmp.eq.s32.totalorder %s25, 1
      %p127 = por %p125, %p126
      %p128 = scmp.ne.s32.totalorder %s119, %s120
      %p129 = scmp.eq.s32.totalorder %s25, 0
      %p130 = por %p128, %p129
      %p131 = scmp.ne.s32.totalorder %s119, %s120
      %p132 = scmp.eq.s32.totalorder %s26, 1
      %p133 = por %p131, %p132
      %p135 = scmp.ne.s32.totalorder %s120, %s134
      %p136 = scmp.eq.s32.totalorder %s26, 0
      %p137 = por %p135, %p136
      %s139 = sadd.s32 %s138, 1
      %p142 = scmp.eq.s32.totalorder %s20, 1
      %p143 = scmp.ne.s32.totalorder %s138, %s140
      %p144 = scmp.eq.s32.totalorder %s20, 0
      %p145 = por %p143, %p144
      %p146 = scmp.ne.s32.totalorder %s138, %s140
      %p147 = scmp.eq.s32.totalorder %s25, 1
      %p148 = por %p146, %p147
      %p149 = scmp.ne.s32.totalorder %s140, %s141
      %p150 = scmp.eq.s32.totalorder %s25, 0
      %p151 = por %p149, %p150
      %p152 = scmp.ne.s32.totalorder %s140, %s141
      %p153 = scmp.eq.s32.totalorder %s26, 1
      %p154 = por %p152, %p153
      %p156 = scmp.ne.s32.totalorder %s141, %s155
      %p157 = scmp.eq.s32.totalorder %s26, 0
      %p158 = por %p156, %p157
      %s160 = sadd.s32 %s159, 1
      %p163 = scmp.eq.s32.totalorder %s20, 1
      %p164 = scmp.ne.s32.totalorder %s159, %s161
      %p165 = scmp.eq.s32.totalorder %s20, 0
      %p166 = por %p164, %p165
      %p167 = scmp.ne.s32.totalorder %s159, %s161
      %p168 = scmp.eq.s32.totalorder %s25, 1
      %p169 = por %p167, %p168
      %p170 = scmp.ne.s32.totalorder %s161, %s162
      %p171 = scmp.eq.s32.totalorder %s25, 0
      %p172 = por %p170, %p171
      %p173 = scmp.ne.s32.totalorder %s161, %s162
      %p174 = scmp.eq.s32.totalorder %s26, 1
      %p175 = por %p173, %p174
      %p177 = scmp.ne.s32.totalorder %s162, %s176
      %p178 = scmp.eq.s32.totalorder %s26, 0
      %p179 = por %p177, %p178
      %s181 = sadd.s32 %s180, 1
      %p184 = scmp.eq.s32.totalorder %s20, 1
      %p185 = scmp.ne.s32.totalorder %s180, %s182
      %p186 = scmp.eq.s32.totalorder %s20, 0
      %p187 = por %p185, %p186
      %p188 = scmp.ne.s32.totalorder %s180, %s182
      %p189 = scmp.eq.s32.totalorder %s25, 1
      %p190 = por %p188, %p189
      %p191 = scmp.ne.s32.totalorder %s182, %s183
      %p192 = scmp.eq.s32.totalorder %s25, 0
      %p193 = por %p191, %p192
      %p194 = scmp.ne.s32.totalorder %s182, %s183
      %p195 = scmp.eq.s32.totalorder %s26, 1
      %p196 = por %p194, %p195
      %p198 = scmp.ne.s32.totalorder %s183, %s197
      %p199 = scmp.eq.s32.totalorder %s26, 0
      %p200 = por %p198, %p199
      %s202 = sadd.s32 %s201, 1
      %p205 = scmp.eq.s32.totalorder %s20, 1
      %p206 = scmp.ne.s32.totalorder %s201, %s203
      %p207 = scmp.eq.s32.totalorder %s20, 0
      %p208 = por %p206, %p207
      %p209 = scmp.ne.s32.totalorder %s201, %s203
      %p210 = scmp.eq.s32.totalorder %s25, 1
      %p211 = por %p209, %p210
      %p212 = scmp.ne.s32.totalorder %s203, %s204
      %p213 = scmp.eq.s32.totalorder %s25, 0
      %p214 = por %p212, %p213
      %p215 = scmp.ne.s32.totalorder %s203, %s204
      %p216 = scmp.eq.s32.totalorder %s26, 1
      %p217 = por %p215, %p216
      %p219 = scmp.ne.s32.totalorder %s204, %s218
      %p220 = scmp.eq.s32.totalorder %s26, 0
      %p221 = por %p219, %p220
      %s222 = ssub.s32 %s20, %s27
      %p223 = scmp.eq.s32.totalorder %s222, 0
      %s225 = sadd.s32 %s224, 1
      %s226 = scalar_select %p223, %s224, %s225
      %p229 = pneg %p223
      %p230 = scmp.eq.s32.totalorder %s20, 1
      %p231 = por %p229, %p230
      %p232 = scmp.ne.s32.totalorder %s224, %s227
      %p233 = scmp.eq.s32.totalorder %s20, 0
      %p234 = por %p232, %p233
      %p235 = scmp.ne.s32.totalorder %s224, %s227
      %p236 = scmp.eq.s32.totalorder %s25, 1
      %p237 = por %p235, %p236
      %p238 = scmp.ne.s32.totalorder %s227, %s228
      %p239 = scmp.eq.s32.totalorder %s25, 0
      %p240 = por %p238, %p239
      %p241 = scmp.ne.s32.totalorder %s227, %s228
      %p242 = scmp.eq.s32.totalorder %s26, 1
      %p243 = por %p241, %p242
      %p245 = scmp.ne.s32.totalorder %s228, %s244
      %p246 = scmp.eq.s32.totalorder %s26, 0
      %p247 = por %p245, %p246
      %p248 = scmp.le.s32.totalorder 1, %s20
      %p249 = scmp.lt.s32.totalorder %s20, 3
      %p250 = pnand %p248, %p249
      %p251 = pneg %p250
      // Predicated region
      $region9: #{tpu_custom_call.1} parent=5 // pred_check
        _
      $region10: #{tpu_custom_call.1} parent=5 // pred_check_branch
        %253 = sbr.rel (%p250) target = $region12
      $region11: #{tpu_custom_call.1} parent=5 // pred_region
        %s254 = ssub.s32 %s20, 1
        // Predicated region
        $region13: #{tpu_custom_call.1} parent=11 // pred_check
          %p255 = pneg %p67
        $region14: #{tpu_custom_call.1} parent=11 // pred_check_branch
          %257 = sbr.rel (%p255) target = $region16
        $region15: #{tpu_custom_call.1} parent=11 // pred_region
          _
        $region16: #{tpu_custom_call.1} parent=11 // pred_fallthru
          _
        // Predicated region
        $region17: #{tpu_custom_call.1} parent=11 // pred_check
          %p258 = pneg %p88
        $region18: #{tpu_custom_call.1} parent=11 // pred_check_branch
          %260 = sbr.rel (%p258) target = $region20
        $region19: #{tpu_custom_call.1} parent=11 // pred_region
          _
        $region20: #{tpu_custom_call.1} parent=11 // pred_fallthru
          _
        // Predicated region
        $region21: #{tpu_custom_call.1} parent=11 // pred_check
          %p261 = pneg %p109
        $region22: #{tpu_custom_call.1} parent=11 // pred_check_branch
          %263 = sbr.rel (%p261) target = $region24
        $region23: #{tpu_custom_call.1} parent=11 // pred_region
          _
        $region24: #{tpu_custom_call.1} parent=11 // pred_fallthru
          _
        // Predicated region
        $region25: #{tpu_custom_call.1} parent=11 // pred_check
          %p264 = pneg %p130
        $region26: #{tpu_custom_call.1} parent=11 // pred_check_branch
          %266 = sbr.rel (%p264) target = $region28
        $region27: #{tpu_custom_call.1} parent=11 // pred_region
          _
        $region28: #{tpu_custom_call.1} parent=11 // pred_fallthru
          _
        // Predicated region
        $region29: #{tpu_custom_call.1} parent=11 // pred_check
          %p267 = pneg %p151
        $region30: #{tpu_custom_call.1} parent=11 // pred_check_branch
          %269 = sbr.rel (%p267) target = $region32
        $region31: #{tpu_custom_call.1} parent=11 // pred_region
          _
        $region32: #{tpu_custom_call.1} parent=11 // pred_fallthru
          _
        // Predicated region
        $region33: #{tpu_custom_call.1} parent=11 // pred_check
          %p270 = pneg %p172
        $region34: #{tpu_custom_call.1} parent=11 // pred_check_branch
          %272 = sbr.rel (%p270) target = $region36
        $region35: #{tpu_custom_call.1} parent=11 // pred_region
          _
        $region36: #{tpu_custom_call.1} parent=11 // pred_fallthru
          _
        // Predicated region
        $region37: #{tpu_custom_call.1} parent=11 // pred_check
          %p273 = pneg %p193
        $region38: #{tpu_custom_call.1} parent=11 // pred_check_branch
          %275 = sbr.rel (%p273) target = $region40
        $region39: #{tpu_custom_call.1} parent=11 // pred_region
          _
        $region40: #{tpu_custom_call.1} parent=11 // pred_fallthru
          _
        // Predicated region
        $region41: #{tpu_custom_call.1} parent=11 // pred_check
          %p276 = pneg %p214
        $region42: #{tpu_custom_call.1} parent=11 // pred_check_branch
          %278 = sbr.rel (%p276) target = $region44
        $region43: #{tpu_custom_call.1} parent=11 // pred_region
          _
        $region44: #{tpu_custom_call.1} parent=11 // pred_fallthru
          _
      $region12: #{tpu_custom_call.1} parent=5 // pred_fallthru
        _
      %p279 = scmp.lt.s32.totalorder %s20, 2
      // Predicated region
      $region45: #{tpu_custom_call.1} parent=5 // pred_check
        %p280 = pneg %p279
      $region46: #{tpu_custom_call.1} parent=5 // pred_check_branch
        %282 = sbr.rel (%p280) target = $region48
      $region47: #{tpu_custom_call.1} parent=5 // pred_region
        // Predicated region
        $region49: #{tpu_custom_call.1} parent=47 // pred_check
          %p283 = pneg %p40
        $region50: #{tpu_custom_call.1} parent=47 // pred_check_branch
          %285 = sbr.rel (%p283) target = $region52
        $region51: #{tpu_custom_call.1} parent=47 // pred_region
          %s286 = smul.u32 16, %s20
          %p287 = scmp.lt.s32.totalorder %s286, 31
          %s288 = scalar_select %p287, %s286, 31
          %s289 = smul.addr %s288, 8
          %s290 = scalar_lea.vmem %s0, %s289
          %s291 = smul.u32 16, %s20
        $region52: #{tpu_custom_call.1} parent=47 // pred_fallthru
          _
      $region48: #{tpu_custom_call.1} parent=5 // pred_fallthru
        _
      %p292 = scmp.le.s32.totalorder 1, %s20
      %p293 = scmp.lt.s32.totalorder %s20, 3
      %p294 = pnand %p292, %p293
      %p295 = pneg %p294
      // Predicated region
      $region53: #{tpu_custom_call.1} parent=5 // pred_check
        _
      $region54: #{tpu_custom_call.1} parent=5 // pred_check_branch
        %297 = sbr.rel (%p294) target = $region56
      $region55: #{tpu_custom_call.1} parent=5 // pred_region
        %s298 = ssub.s32 %s20, 1
        %s299 = smul.u32 16, %s25
        %p300 = scmp.lt.s32.totalorder %s299, 31
        %s301 = scalar_select %p300, %s299, 31
        %s302 = smul.addr %s301, 8
        %s303 = scalar_lea.vmem %s0, %s302
        %p304 = pneg %p46
        %p305 = pneg %p43
        %p306 = pneg %p67
        %p307 = pneg %p64
        %p308 = pneg %p88
        %p309 = pneg %p85
        %p310 = pneg %p109
        %p311 = pneg %p106
        %p312 = pneg %p130
        %p313 = pneg %p127
        %p314 = pneg %p151
        %p315 = pneg %p148
        %p316 = pneg %p172
        %p317 = pneg %p169
        %p318 = pneg %p193
        %p319 = pneg %p190
        %p320 = pneg %p214
        %p321 = pneg %p211
        %p322 = pneg %p240
        %p323 = pneg %p237
        %s324 = sand.u32 %s227, 1
        %s325 = scalar_lea.sflag [#allocation4], %s324
        %s326 = sand.u32 %s227, 1
        %s327 = scalar_lea.vmem [#allocation3], %s326
        %s328 = smul.u32 16, %s25
        %p329 = scmp.lt.s32.totalorder %s328, 31
        %s330 = scalar_select %p329, %s328, 31
        %s331 = smul.addr %s330, 8
        %s332 = scalar_lea.vmem %s0, %s331
        %s333 = smul.u32 16, %s25
        %v334 = vld [vmem:[%s1] sm:$0xff]
        %v335 = vld [vmem:[%s1 + $0x8] sm:$0xff]
        %v336 = vld [vmem:[%s1 + $0x10] sm:$0xff]
        %v337 = vld [vmem:[%s1 + $0x18] sm:$0xff]
        %v338 = vld [vmem:[%s1 + $0x20] sm:$0xff]
        %v339 = vld [vmem:[%s1 + $0x28] sm:$0xff]
        %v340 = vld [vmem:[%s1 + $0x30] sm:$0xff]
        %v341 = vld [vmem:[%s1 + $0x38] sm:$0xff]
        %v342 = vld [vmem:[%s1 + $0x40] sm:$0xff]
        %v343 = vld [vmem:[%s1 + $0x48] sm:$0xff]
        %v344 = vld [vmem:[%s1 + $0x50] sm:$0xff]
        %v345 = vld [vmem:[%s1 + $0x58] sm:$0xff]
        %v346 = vld [vmem:[%s1 + $0x60] sm:$0xff]
        %v347 = vld [vmem:[%s1 + $0x68] sm:$0xff]
        %v348 = vld [vmem:[%s1 + $0x70] sm:$0xff]
        %v349 = vld [vmem:[%s1 + $0x78] sm:$0xff]
        %v350 = vld [vmem:[%s332] sm:$0xff]
        %v351 = vld [vmem:[%s332 + $0x8] sm:$0xff]
        %v352 = vld [vmem:[%s332 + $0x10] sm:$0xff]
        %v353 = vld [vmem:[%s332 + $0x18] sm:$0xff]
        %v354 = vld [vmem:[%s332 + $0x20] sm:$0xff]
        %v355 = vld [vmem:[%s332 + $0x28] sm:$0xff]
        %v356 = vld [vmem:[%s332 + $0x30] sm:$0xff]
        %v357 = vld [vmem:[%s332 + $0x38] sm:$0xff]
        %v358 = vld [vmem:[%s332 + $0x40] sm:$0xff]
        %v359 = vld [vmem:[%s332 + $0x48] sm:$0xff]
        %v360 = vld [vmem:[%s332 + $0x50] sm:$0xff]
        %v361 = vld [vmem:[%s332 + $0x58] sm:$0xff]
        %v362 = vld [vmem:[%s332 + $0x60] sm:$0xff]
        %v363 = vld [vmem:[%s332 + $0x68] sm:$0xff]
        %v364 = vld [vmem:[%s332 + $0x70] sm:$0xff]
        %v365 = vld [vmem:[%s332 + $0x78] sm:$0xff]
        %v366 = vld [vmem:[%s2] sm:$0xff]
        %v367 = vld [vmem:[%s2 + $0x8] sm:$0xff]
        %v368 = vld [vmem:[%s2 + $0x10] sm:$0xff]
        %v369 = vld [vmem:[%s2 + $0x18] sm:$0xff]
        %v370 = vld [vmem:[%s2 + $0x20] sm:$0xff]
        %v371 = vld [vmem:[%s2 + $0x28] sm:$0xff]
        %v372 = vld [vmem:[%s2 + $0x30] sm:$0xff]
        %v373 = vld [vmem:[%s2 + $0x38] sm:$0xff]
        %v374 = vld [vmem:[%s2 + $0x40] sm:$0xff]
        %v375 = vld [vmem:[%s2 + $0x48] sm:$0xff]
        %v376 = vld [vmem:[%s2 + $0x50] sm:$0xff]
        %v377 = vld [vmem:[%s2 + $0x58] sm:$0xff]
        %v378 = vld [vmem:[%s2 + $0x60] sm:$0xff]
        %v379 = vld [vmem:[%s2 + $0x68] sm:$0xff]
        %v380 = vld [vmem:[%s2 + $0x70] sm:$0xff]
        %v381 = vld [vmem:[%s2 + $0x78] sm:$0xff]
        %383 = vset.pattern.permute.xlu0 0
        %384 = vperm.xlu0 %383, %v366
        %v385 = vpop.permute.xlu0 %384
        %388 = vset.pattern.permute.xlu0 0
        %389 = vperm.xlu0 %388, %v367
        %v390 = vpop.permute.xlu0 %389
        %393 = vset.pattern.permute.xlu0 0
        %394 = vperm.xlu0 %393, %v368
        %v395 = vpop.permute.xlu0 %394
        %398 = vset.pattern.permute.xlu0 0
        %399 = vperm.xlu0 %398, %v369
        %v400 = vpop.permute.xlu0 %399
        %403 = vset.pattern.permute.xlu0 0
        %404 = vperm.xlu0 %403, %v370
        %v405 = vpop.permute.xlu0 %404
        %408 = vset.pattern.permute.xlu0 0
        %409 = vperm.xlu0 %408, %v371
        %v410 = vpop.permute.xlu0 %409
        %413 = vset.pattern.permute.xlu0 0
        %414 = vperm.xlu0 %413, %v372
        %v415 = vpop.permute.xlu0 %414
        %418 = vset.pattern.permute.xlu0 0
        %419 = vperm.xlu0 %418, %v373
        %v420 = vpop.permute.xlu0 %419
        %423 = vset.pattern.permute.xlu0 0
        %424 = vperm.xlu0 %423, %v374
        %v425 = vpop.permute.xlu0 %424
        %428 = vset.pattern.permute.xlu0 0
        %429 = vperm.xlu0 %428, %v375
        %v430 = vpop.permute.xlu0 %429
        %433 = vset.pattern.permute.xlu0 0
        %434 = vperm.xlu0 %433, %v376
        %v435 = vpop.permute.xlu0 %434
        %438 = vset.pattern.permute.xlu0 0
        %439 = vperm.xlu0 %438, %v377
        %v440 = vpop.permute.xlu0 %439
        %443 = vset.pattern.permute.xlu0 0
        %444 = vperm.xlu0 %443, %v378
        %v445 = vpop.permute.xlu0 %444
        %448 = vset.pattern.permute.xlu0 0
        %449 = vperm.xlu0 %448, %v379
        %v450 = vpop.permute.xlu0 %449
        %453 = vset.pattern.permute.xlu0 0
        %454 = vperm.xlu0 %453, %v380
        %v455 = vpop.permute.xlu0 %454
        %458 = vset.pattern.permute.xlu0 0
        %459 = vperm.xlu0 %458, %v381
        %v460 = vpop.permute.xlu0 %459
        %vm462 = vcmask 130048
        %v464 = vsel %vm462, %v334, 0
        %v467 = vsel %vm462, %v335, 0
        %v470 = vsel %vm462, %v336, 0
        %v473 = vsel %vm462, %v337, 0
        %v476 = vsel %vm462, %v338, 0
        %v479 = vsel %vm462, %v339, 0
        %v482 = vsel %vm462, %v340, 0
        %v485 = vsel %vm462, %v341, 0
        %v488 = vsel %vm462, %v342, 0
        %v491 = vsel %vm462, %v343, 0
        %v494 = vsel %vm462, %v344, 0
        %v497 = vsel %vm462, %v345, 0
        %v500 = vsel %vm462, %v346, 0
        %v503 = vsel %vm462, %v347, 0
        %v506 = vsel %vm462, %v348, 0
        %v509 = vsel %vm462, %v349, 0
        %v512 = vsel %vm462, %v350, 0
        %v515 = vsel %vm462, %v351, 0
        %v518 = vsel %vm462, %v352, 0
        %v521 = vsel %vm462, %v353, 0
        %v524 = vsel %vm462, %v354, 0
        %v527 = vsel %vm462, %v355, 0
        %v530 = vsel %vm462, %v356, 0
        %v533 = vsel %vm462, %v357, 0
        %v536 = vsel %vm462, %v358, 0
        %v539 = vsel %vm462, %v359, 0
        %v542 = vsel %vm462, %v360, 0
        %v545 = vsel %vm462, %v361, 0
        %v548 = vsel %vm462, %v362, 0
        %v551 = vsel %vm462, %v363, 0
        %v554 = vsel %vm462, %v364, 0
        %v557 = vsel %vm462, %v365, 0
        %559 = vmatprep.subr.mxu0 0.0
        %560 = vmatpush1.xpose.msra.mxu0 %v512
        %561 = vmatprep.subr.mxu0 0.0
        %562 = vmatpush1.xpose.msra.mxu0 %v515
        %563 = vmatprep.subr.mxu0 0.0
        %564 = vmatpush1.xpose.msra.mxu0 %v518
        %565 = vmatprep.subr.mxu0 0.0
        %566 = vmatpush1.xpose.msra.mxu0 %v521
        %567 = vmatprep.subr.mxu0 0.0
        %568 = vmatpush1.xpose.msra.mxu0 %v524
        %569 = vmatprep.subr.mxu0 0.0
        %570 = vmatpush1.xpose.msra.mxu0 %v527
        %571 = vmatprep.subr.mxu0 0.0
        %572 = vmatpush1.xpose.msra.mxu0 %v530
        %573 = vmatprep.subr.mxu0 0.0
        %574 = vmatpush1.xpose.msra.mxu0 %v533
        %575 = vmatprep.subr.mxu0 0.0
        %576 = vmatpush1.xpose.msra.mxu0 %v536
        %577 = vmatprep.subr.mxu0 0.0
        %578 = vmatpush1.xpose.msra.mxu0 %v539
        %579 = vmatprep.subr.mxu0 0.0
        %580 = vmatpush1.xpose.msra.mxu0 %v542
        %581 = vmatprep.subr.mxu0 0.0
        %582 = vmatpush1.xpose.msra.mxu0 %v545
        %583 = vmatprep.subr.mxu0 0.0
        %584 = vmatpush1.xpose.msra.mxu0 %v548
        %585 = vmatprep.subr.mxu0 0.0
        %586 = vmatpush1.xpose.msra.mxu0 %v551
        %587 = vmatprep.subr.mxu0 0.0
        %588 = vmatpush1.xpose.msra.mxu0 %v554
        %589 = vmatprep.subr.mxu0 0.0
        %590 = vmatpush1.xpose.msra.mxu0 %v557
        %591 = vmatprep.subr.mxu0 0.0
        %592 = vmatpush1.xpose.msra.mxu0 0.0
        %593 = vmatprep.subr.mxu0 0.0
        %594 = vmatpush1.xpose.msra.mxu0 0.0
        %595 = vmatprep.subr.mxu0 0.0
        %596 = vmatpush1.xpose.msra.mxu0 0.0
        %597 = vmatprep.subr.mxu0 0.0
        %598 = vmatpush1.xpose.msra.mxu0 0.0
        %599 = vmatprep.subr.mxu0 0.0
        %600 = vmatpush1.xpose.msra.mxu0 0.0
        %601 = vmatprep.subr.mxu0 0.0
        %602 = vmatpush1.xpose.msra.mxu0 0.0
        %603 = vmatprep.subr.mxu0 0.0
        %604 = vmatpush1.xpose.msra.mxu0 0.0
        %605 = vmatprep.subr.mxu0 0.0
        %606 = vmatpush1.xpose.msra.mxu0 0.0
        %607 = vmatprep.subr.mxu0 0.0
        %608 = vmatpush1.xpose.msra.mxu0 0.0
        %609 = vmatprep.subr.mxu0 0.0
        %610 = vmatpush1.xpose.msra.mxu0 0.0
        %611 = vmatprep.subr.mxu0 0.0
        %612 = vmatpush1.xpose.msra.mxu0 0.0
        %613 = vmatprep.subr.mxu0 0.0
        %614 = vmatpush1.xpose.msra.mxu0 0.0
        %615 = vmatprep.subr.mxu0 0.0
        %616 = vmatpush1.xpose.msra.mxu0 0.0
        %617 = vmatprep.subr.mxu0 0.0
        %618 = vmatpush1.xpose.msra.mxu0 0.0
        %619 = vmatprep.subr.mxu0 0.0
        %620 = vmatpush1.xpose.msra.mxu0 0.0
        %621 = vmatprep.subr.mxu0 0.0
        %622 = vmatpush1.xpose.msra.mxu0 0.0
        %623 = vmatprep.mubr.f32.mxu0 0.0
        %624 = vmatmul.mubr.f32.gmra.mrb[0].mxu0 %v464
        %v625 = vpop.f32.mrb[0].mxu0
        %v626 = vadd.f32 %v385, %v625
        %v627 = vpop.f32.mrb[0].mxu0
        %628 = vmatprep.mubr.f32.mxu0 0.0
        %629 = vmatmul.mubr.f32.gmra.mrb[0].mxu0 %v467
        %v630 = vpop.f32.mrb[0].mxu0
        %v631 = vadd.f32 %v390, %v630
        %v632 = vpop.f32.mrb[0].mxu0
        %633 = vmatprep.mubr.f32.mxu0 0.0
        %634 = vmatmul.mubr.f32.gmra.mrb[0].mxu0 %v470
        %v635 = vpop.f32.mrb[0].mxu0
        %v636 = vadd.f32 %v395, %v635
        %v637 = vpop.f32.mrb[0].mxu0
        %638 = vmatprep.mubr.f32.mxu0 0.0
        %639 = vmatmul.mubr.f32.gmra.mrb[0].mxu0 %v473
        %v640 = vpop.f32.mrb[0].mxu0
        %v641 = vadd.f32 %v400, %v640
        %v642 = vpop.f32.mrb[0].mxu0
        %643 = vmatprep.mubr.f32.mxu0 0.0
        %644 = vmatmul.mubr.f32.gmra.mrb[0].mxu0 %v476
        %v645 = vpop.f32.mrb[0].mxu0
        %v646 = vadd.f32 %v405, %v645
        %v647 = vpop.f32.mrb[0].mxu0
        %648 = vmatprep.mubr.f32.mxu0 0.0
        %649 = vmatmul.mubr.f32.gmra.mrb[0].mxu0 %v479
        %v650 = vpop.f32.mrb[0].mxu0
        %v651 = vadd.f32 %v410, %v650
        %v652 = vpop.f32.mrb[0].mxu0
        %653 = vmatprep.mubr.f32.mxu0 0.0
        %654 = vmatmul.mubr.f32.gmra.mrb[0].mxu0 %v482
        %v655 = vpop.f32.mrb[0].mxu0
        %v656 = vadd.f32 %v415, %v655
        %v657 = vpop.f32.mrb[0].mxu0
        %658 = vmatprep.mubr.f32.mxu0 0.0
        %659 = vmatmul.mubr.f32.gmra.mrb[0].mxu0 %v485
        %v660 = vpop.f32.mrb[0].mxu0
        %v661 = vadd.f32 %v420, %v660
        %v662 = vpop.f32.mrb[0].mxu0
        %663 = vmatprep.mubr.f32.mxu0 0.0
        %664 = vmatmul.mubr.f32.gmra.mrb[0].mxu0 %v488
        %v665 = vpop.f32.mrb[0].mxu0
        %v666 = vadd.f32 %v425, %v665
        %v667 = vpop.f32.mrb[0].mxu0
        %668 = vmatprep.mubr.f32.mxu0 0.0
        %669 = vmatmul.mubr.f32.gmra.mrb[0].mxu0 %v491
        %v670 = vpop.f32.mrb[0].mxu0
        %v671 = vadd.f32 %v430, %v670
        %v672 = vpop.f32.mrb[0].mxu0
        %673 = vmatprep.mubr.f32.mxu0 0.0
        %674 = vmatmul.mubr.f32.gmra.mrb[0].mxu0 %v494
        %v675 = vpop.f32.mrb[0].mxu0
        %v676 = vadd.f32 %v435, %v675
        %v677 = vpop.f32.mrb[0].mxu0
        %678 = vmatprep.mubr.f32.mxu0 0.0
        %679 = vmatmul.mubr.f32.gmra.mrb[0].mxu0 %v497
        %v680 = vpop.f32.mrb[0].mxu0
        %v681 = vadd.f32 %v440, %v680
        %v682 = vpop.f32.mrb[0].mxu0
        %683 = vmatprep.mubr.f32.mxu0 0.0
        %684 = vmatmul.mubr.f32.gmra.mrb[0].mxu0 %v500
        %v685 = vpop.f32.mrb[0].mxu0
        %v686 = vadd.f32 %v445, %v685
        %v687 = vpop.f32.mrb[0].mxu0
        %688 = vmatprep.mubr.f32.mxu0 0.0
        %689 = vmatmul.mubr.f32.gmra.mrb[0].mxu0 %v503
        %v690 = vpop.f32.mrb[0].mxu0
        %v691 = vadd.f32 %v450, %v690
        %v692 = vpop.f32.mrb[0].mxu0
        %693 = vmatprep.mubr.f32.mxu0 0.0
        %694 = vmatmul.mubr.f32.gmra.mrb[0].mxu0 %v506
        %v695 = vpop.f32.mrb[0].mxu0
        %v696 = vadd.f32 %v455, %v695
        %v697 = vpop.f32.mrb[0].mxu0
        %698 = vmatprep.mubr.f32.mxu0 0.0
        %699 = vmatmul.mubr.f32.gmra.mrb[0].mxu0 %v509
        %v700 = vpop.f32.mrb[0].mxu0
        %v701 = vadd.f32 %v460, %v700
        %v702 = vpop.f32.mrb[0].mxu0
        %703 = vdwg.mxu0
        %v704 = vmax.f32 %v626, 0.0
        %v705 = vmax.f32 %v631, 0.0
        %v706 = vmax.f32 %v636, 0.0
        %v707 = vmax.f32 %v641, 0.0
        %v708 = vmax.f32 %v646, 0.0
        %v709 = vmax.f32 %v651, 0.0
        %v710 = vmax.f32 %v656, 0.0
        %v711 = vmax.f32 %v661, 0.0
        %v712 = vmax.f32 %v666, 0.0
        %v713 = vmax.f32 %v671, 0.0
        %v714 = vmax.f32 %v676, 0.0
        %v715 = vmax.f32 %v681, 0.0
        %v716 = vmax.f32 %v686, 0.0
        %v717 = vmax.f32 %v691, 0.0
        %v718 = vmax.f32 %v696, 0.0
        %v719 = vmax.f32 %v701, 0.0
        %v720 = vld [vmem:[%s3] sm:$0xff]
        %v721 = vld [vmem:[%s3 + $0x8] sm:$0xff]
        %v722 = vld [vmem:[%s3 + $0x10] sm:$0xff]
        %v723 = vld [vmem:[%s3 + $0x18] sm:$0xff]
        %v724 = vld [vmem:[%s3 + $0x20] sm:$0xff]
        %v725 = vld [vmem:[%s3 + $0x28] sm:$0xff]
        %v726 = vld [vmem:[%s3 + $0x30] sm:$0xff]
        %v727 = vld [vmem:[%s3 + $0x38] sm:$0xff]
        %v728 = vld [vmem:[%s4] sm:$0xff]
        %v729 = vld [vmem:[%s4 + $0x8] sm:$0xff]
        %v730 = vld [vmem:[%s4 + $0x10] sm:$0xff]
        %v731 = vld [vmem:[%s4 + $0x18] sm:$0xff]
        %v732 = vld [vmem:[%s4 + $0x20] sm:$0xff]
        %v733 = vld [vmem:[%s4 + $0x28] sm:$0xff]
        %v734 = vld [vmem:[%s4 + $0x30] sm:$0xff]
        %v735 = vld [vmem:[%s4 + $0x38] sm:$0xff]
        %737 = vset.pattern.permute.xlu0 0
        %738 = vperm.xlu0 %737, %v728
        %v739 = vpop.permute.xlu0 %738
        %742 = vset.pattern.permute.xlu0 0
        %743 = vperm.xlu0 %742, %v729
        %v744 = vpop.permute.xlu0 %743
        %747 = vset.pattern.permute.xlu0 0
        %748 = vperm.xlu0 %747, %v730
        %v749 = vpop.permute.xlu0 %748
        %752 = vset.pattern.permute.xlu0 0
        %753 = vperm.xlu0 %752, %v731
        %v754 = vpop.permute.xlu0 %753
        %757 = vset.pattern.permute.xlu0 0
        %758 = vperm.xlu0 %757, %v732
        %v759 = vpop.permute.xlu0 %758
        %762 = vset.pattern.permute.xlu0 0
        %763 = vperm.xlu0 %762, %v733
        %v764 = vpop.permute.xlu0 %763
        %767 = vset.pattern.permute.xlu0 0
        %768 = vperm.xlu0 %767, %v734
        %v769 = vpop.permute.xlu0 %768
        %772 = vset.pattern.permute.xlu0 0
        %773 = vperm.xlu0 %772, %v735
        %v774 = vpop.permute.xlu0 %773
        %776 = vmatprep.subr.mxu0 0.0
        %777 = vmatpush1.msra.mxu0 %v704
        %778 = vmatprep.subr.mxu0 0.0
        %779 = vmatpush1.msra.mxu0 %v705
        %780 = vmatprep.subr.mxu0 0.0
        %781 = vmatpush1.msra.mxu0 %v706
        %782 = vmatprep.subr.mxu0 0.0
        %783 = vmatpush1.msra.mxu0 %v707
        %784 = vmatprep.subr.mxu0 0.0
        %785 = vmatpush1.msra.mxu0 %v708
        %786 = vmatprep.subr.mxu0 0.0
        %787 = vmatpush1.msra.mxu0 %v709
        %788 = vmatprep.subr.mxu0 0.0
        %789 = vmatpush1.msra.mxu0 %v710
        %790 = vmatprep.subr.mxu0 0.0
        %791 = vmatpush1.msra.mxu0 %v711
        %792 = vmatprep.subr.mxu0 0.0
        %793 = vmatpush1.msra.mxu0 %v712
        %794 = vmatprep.subr.mxu0 0.0
        %795 = vmatpush1.msra.mxu0 %v713
        %796 = vmatprep.subr.mxu0 0.0
        %797 = vmatpush1.msra.mxu0 %v714
        %798 = vmatprep.subr.mxu0 0.0
        %799 = vmatpush1.msra.mxu0 %v715
        %800 = vmatprep.subr.mxu0 0.0
        %801 = vmatpush1.msra.mxu0 %v716
        %802 = vmatprep.subr.mxu0 0.0
        %803 = vmatpush1.msra.mxu0 %v717
        %804 = vmatprep.subr.mxu0 0.0
        %805 = vmatpush1.msra.mxu0 %v718
        %806 = vmatprep.subr.mxu0 0.0
        %807 = vmatpush1.msra.mxu0 %v719
        %808 = vmatprep.subr.mxu0 0.0
        %809 = vmatpush1.msra.mxu0 0.0
        %810 = vmatprep.subr.mxu0 0.0
        %811 = vmatpush1.msra.mxu0 0.0
        %812 = vmatprep.subr.mxu0 0.0
        %813 = vmatpush1.msra.mxu0 0.0
        %814 = vmatprep.subr.mxu0 0.0
        %815 = vmatpush1.msra.mxu0 0.0
        %816 = vmatprep.subr.mxu0 0.0
        %817 = vmatpush1.msra.mxu0 0.0
        %818 = vmatprep.subr.mxu0 0.0
        %819 = vmatpush1.msra.mxu0 0.0
        %820 = vmatprep.subr.mxu0 0.0
        %821 = vmatpush1.msra.mxu0 0.0
        %822 = vmatprep.subr.mxu0 0.0
        %823 = vmatpush1.msra.mxu0 0.0
        %824 = vmatprep.subr.mxu0 0.0
        %825 = vmatpush1.msra.mxu0 0.0
        %826 = vmatprep.subr.mxu0 0.0
        %827 = vmatpush1.msra.mxu0 0.0
        %828 = vmatprep.subr.mxu0 0.0
        %829 = vmatpush1.msra.mxu0 0.0
        %830 = vmatprep.subr.mxu0 0.0
        %831 = vmatpush1.msra.mxu0 0.0
        %832 = vmatprep.subr.mxu0 0.0
        %833 = vmatpush1.msra.mxu0 0.0
        %834 = vmatprep.subr.mxu0 0.0
        %835 = vmatpush1.msra.mxu0 0.0
        %836 = vmatprep.subr.mxu0 0.0
        %837 = vmatpush1.msra.mxu0 0.0
        %838 = vmatprep.subr.mxu0 0.0
        %839 = vmatpush1.msra.mxu0 0.0
        %840 = vmatprep.mubr.f32.mxu0 0.0
        %841 = vmatmul.mubr.f32.gmra.mrb[0].mxu0 %v720
        %v842 = vpop.f32.mrb[0].mxu0
        %v843 = vadd.f32 %v739, %v842
        %v844 = vpop.f32.mrb[0].mxu0
        %845 = vmatprep.mubr.f32.mxu0 0.0
        %846 = vmatmul.mubr.f32.gmra.mrb[0].mxu0 %v721
        %v847 = vpop.f32.mrb[0].mxu0
        %v848 = vadd.f32 %v744, %v847
        %v849 = vpop.f32.mrb[0].mxu0
        %850 = vmatprep.mubr.f32.mxu0 0.0
        %851 = vmatmul.mubr.f32.gmra.mrb[0].mxu0 %v722
        %v852 = vpop.f32.mrb[0].mxu0
        %v853 = vadd.f32 %v749, %v852
        %v854 = vpop.f32.mrb[0].mxu0
        %855 = vmatprep.mubr.f32.mxu0 0.0
        %856 = vmatmul.mubr.f32.gmra.mrb[0].mxu0 %v723
        %v857 = vpop.f32.mrb[0].mxu0
        %v858 = vadd.f32 %v754, %v857
        %v859 = vpop.f32.mrb[0].mxu0
        %860 = vmatprep.mubr.f32.mxu0 0.0
        %861 = vmatmul.mubr.f32.gmra.mrb[0].mxu0 %v724
        %v862 = vpop.f32.mrb[0].mxu0
        %v863 = vadd.f32 %v759, %v862
        %v864 = vpop.f32.mrb[0].mxu0
        %865 = vmatprep.mubr.f32.mxu0 0.0
        %866 = vmatmul.mubr.f32.gmra.mrb[0].mxu0 %v725
        %v867 = vpop.f32.mrb[0].mxu0
        %v868 = vadd.f32 %v764, %v867
        %v869 = vpop.f32.mrb[0].mxu0
        %870 = vmatprep.mubr.f32.mxu0 0.0
        %871 = vmatmul.mubr.f32.gmra.mrb[0].mxu0 %v726
        %v872 = vpop.f32.mrb[0].mxu0
        %v873 = vadd.f32 %v769, %v872
        %v874 = vpop.f32.mrb[0].mxu0
        %875 = vmatprep.mubr.f32.mxu0 0.0
        %876 = vmatmul.mubr.f32.gmra.mrb[0].mxu0 %v727
        %v877 = vpop.f32.mrb[0].mxu0
        %v878 = vadd.f32 %v774, %v877
        %v879 = vpop.f32.mrb[0].mxu0
        %880 = vdwg.mxu0
        %v881 = vmax.f32 %v843, 0.0
        %v882 = vmax.f32 %v848, 0.0
        %v883 = vmax.f32 %v853, 0.0
        %v884 = vmax.f32 %v858, 0.0
        %v885 = vmax.f32 %v863, 0.0
        %v886 = vmax.f32 %v868, 0.0
        %v887 = vmax.f32 %v873, 0.0
        %v888 = vmax.f32 %v878, 0.0
        %v889 = vld [vmem:[%s5] sm:$0xff]
        %v890 = vld [vmem:[%s5 + $0x8] sm:$0xff]
        %v891 = vld [vmem:[%s5 + $0x10] sm:$0xff]
        %v892 = vld [vmem:[%s5 + $0x18] sm:$0xff]
        %v893 = vld [vmem:[%s6] sm:$0xff]
        %v894 = vld [vmem:[%s6 + $0x8] sm:$0xff]
        %v895 = vld [vmem:[%s6 + $0x10] sm:$0xff]
        %v896 = vld [vmem:[%s6 + $0x18] sm:$0xff]
        %898 = vset.pattern.permute.xlu0 0
        %899 = vperm.xlu0 %898, %v893
        %v900 = vpop.permute.xlu0 %899
        %903 = vset.pattern.permute.xlu0 0
        %904 = vperm.xlu0 %903, %v894
        %v905 = vpop.permute.xlu0 %904
        %908 = vset.pattern.permute.xlu0 0
        %909 = vperm.xlu0 %908, %v895
        %v910 = vpop.permute.xlu0 %909
        %913 = vset.pattern.permute.xlu0 0
        %914 = vperm.xlu0 %913, %v896
        %v915 = vpop.permute.xlu0 %914
        %vm917 = vcmask 523264
        %v919 = vsel %vm917, %v889, 0
        %v922 = vsel %vm917, %v890, 0
        %v925 = vsel %vm917, %v891, 0
        %v928 = vsel %vm917, %v892, 0
        %930 = vmatprep.subr.mxu0 0.0
        %931 = vmatpush1.msra.mxu0 %v881
        %932 = vmatprep.subr.mxu0 0.0
        %933 = vmatpush1.msra.mxu0 %v882
        %934 = vmatprep.subr.mxu0 0.0
        %935 = vmatpush1.msra.mxu0 %v883
        %936 = vmatprep.subr.mxu0 0.0
        %937 = vmatpush1.msra.mxu0 %v884
        %938 = vmatprep.subr.mxu0 0.0
        %939 = vmatpush1.msra.mxu0 %v885
        %940 = vmatprep.subr.mxu0 0.0
        %941 = vmatpush1.msra.mxu0 %v886
        %942 = vmatprep.subr.mxu0 0.0
        %943 = vmatpush1.msra.mxu0 %v887
        %944 = vmatprep.subr.mxu0 0.0
        %945 = vmatpush1.msra.mxu0 %v888
        %946 = vmatprep.subr.mxu0 0.0
        %947 = vmatpush1.msra.mxu0 0.0
        %948 = vmatprep.subr.mxu0 0.0
        %949 = vmatpush1.msra.mxu0 0.0
        %950 = vmatprep.subr.mxu0 0.0
        %951 = vmatpush1.msra.mxu0 0.0
        %952 = vmatprep.subr.mxu0 0.0
        %953 = vmatpush1.msra.mxu0 0.0
        %954 = vmatprep.subr.mxu0 0.0
        %955 = vmatpush1.msra.mxu0 0.0
        %956 = vmatprep.subr.mxu0 0.0
        %957 = vmatpush1.msra.mxu0 0.0
        %958 = vmatprep.subr.mxu0 0.0
        %959 = vmatpush1.msra.mxu0 0.0
        %960 = vmatprep.subr.mxu0 0.0
        %961 = vmatpush1.msra.mxu0 0.0
        %962 = vmatprep.subr.mxu0 0.0
        %963 = vmatpush1.msra.mxu0 0.0
        %964 = vmatprep.subr.mxu0 0.0
        %965 = vmatpush1.msra.mxu0 0.0
        %966 = vmatprep.subr.mxu0 0.0
        %967 = vmatpush1.msra.mxu0 0.0
        %968 = vmatprep.subr.mxu0 0.0
        %969 = vmatpush1.msra.mxu0 0.0
        %970 = vmatprep.subr.mxu0 0.0
        %971 = vmatpush1.msra.mxu0 0.0
        %972 = vmatprep.subr.mxu0 0.0
        %973 = vmatpush1.msra.mxu0 0.0
        %974 = vmatprep.subr.mxu0 0.0
        %975 = vmatpush1.msra.mxu0 0.0
        %976 = vmatprep.subr.mxu0 0.0
        %977 = vmatpush1.msra.mxu0 0.0
        %978 = vmatprep.subr.mxu0 0.0
        %979 = vmatpush1.msra.mxu0 0.0
        %980 = vmatprep.subr.mxu0 0.0
        %981 = vmatpush1.msra.mxu0 0.0
        %982 = vmatprep.subr.mxu0 0.0
        %983 = vmatpush1.msra.mxu0 0.0
        %984 = vmatprep.subr.mxu0 0.0
        %985 = vmatpush1.msra.mxu0 0.0
        %986 = vmatprep.subr.mxu0 0.0
        %987 = vmatpush1.msra.mxu0 0.0
        %988 = vmatprep.subr.mxu0 0.0
        %989 = vmatpush1.msra.mxu0 0.0
        %990 = vmatprep.subr.mxu0 0.0
        %991 = vmatpush1.msra.mxu0 0.0
        %992 = vmatprep.subr.mxu0 0.0
        %993 = vmatpush1.msra.mxu0 0.0
        %994 = vmatprep.mubr.f32.mxu0 0.0
        %995 = vmatmul.mubr.f32.gmra.mrb[0].mxu0 %v919
        %v996 = vpop.f32.mrb[0].mxu0
        %v997 = vadd.f32 %v900, %v996
        %v998 = vpop.f32.mrb[0].mxu0
        %999 = vmatprep.mubr.f32.mxu0 0.0
        %1000 = vmatmul.mubr.f32.gmra.mrb[0].mxu0 %v922
        %v1001 = vpop.f32.mrb[0].mxu0
        %v1002 = vadd.f32 %v905, %v1001
        %v1003 = vpop.f32.mrb[0].mxu0
        %1004 = vmatprep.mubr.f32.mxu0 0.0
        %1005 = vmatmul.mubr.f32.gmra.mrb[0].mxu0 %v925
        %v1006 = vpop.f32.mrb[0].mxu0
        %v1007 = vadd.f32 %v910, %v1006
        %v1008 = vpop.f32.mrb[0].mxu0
        %1009 = vmatprep.mubr.f32.mxu0 0.0
        %1010 = vmatmul.mubr.f32.gmra.mrb[0].mxu0 %v928
        %v1011 = vpop.f32.mrb[0].mxu0
        %v1012 = vadd.f32 %v915, %v1011
        %v1013 = vpop.f32.mrb[0].mxu0
        %1014 = vdwg.mxu0
        %v1015 = vmax.f32 %v997, 0.0
        %v1016 = vmax.f32 %v1002, 0.0
        %v1017 = vmax.f32 %v1007, 0.0
        %v1018 = vmax.f32 %v1012, 0.0
        %v1019 = vld [vmem:[%s7] sm:$0xff]
        %v1020 = vld [vmem:[%s7 + $0x8] sm:$0xff]
        %v1021 = vld [vmem:[%s7 + $0x10] sm:$0xff]
        %v1022 = vld [vmem:[%s7 + $0x18] sm:$0xff]
        %1024 = vset.pattern.permute.xlu0 0
        %1025 = vperm.xlu0 %1024, %v1019
        %v1026 = vpop.permute.xlu0 %1025
        %1029 = vset.pattern.permute.xlu0 0
        %1030 = vperm.xlu0 %1029, %v1020
        %v1031 = vpop.permute.xlu0 %1030
        %1034 = vset.pattern.permute.xlu0 0
        %1035 = vperm.xlu0 %1034, %v1021
        %v1036 = vpop.permute.xlu0 %1035
        %1039 = vset.pattern.permute.xlu0 0
        %1040 = vperm.xlu0 %1039, %v1022
        %v1041 = vpop.permute.xlu0 %1040
        %v1043 = vmul.f32 %v1015, %v1026
        %v1044 = vmul.f32 %v1016, %v1031
        %v1045 = vmul.f32 %v1017, %v1036
        %v1046 = vmul.f32 %v1018, %v1041
        %v1047 = vadd.f32 %v1043, %v1044
        %v1048 = vadd.f32 %v1047, %v1045
        %v1049 = vadd.f32 %v1048, %v1046
        %v1050 = vrot.slane %v1049, 4
        %v1051 = vadd.f32 %v1049, %v1050
        %v1052 = vrot.slane %v1051, 2
        %v1053 = vadd.f32 %v1051, %v1052
        %v1054 = vrot.slane %v1053, 1
        %v1055 = vadd.f32 %v1053, %v1054
        %v1056 = vld [vmem:[#allocation2] sm:$0x1]
        %1058 = vset.pattern.permute.xlu0 0
        %1059 = vperm.xlu0 %1058, %v1056
        %v1060 = vpop.permute.xlu0 %1059
        %v1062 = vlaneseq
        %v1063 = vshrl.u32 %v1062, 7
        %v1064 = vsub.s32 0, %v1063
        %v1065 = vrot.slane %v1060, %v1064
        %v1066 = vadd.f32 %v1055, %v1065
        %1067 = vst [vmem:[%s327] sm:$0x1] %v1066
        %s1068 = sand.u32 %s227, 1
        %s1069 = scalar_lea.sflag [#allocation4], %s1068
        %s1070 = sand.u32 %s227, 1
        %s1071 = scalar_lea.vmem [#allocation3], %s1070
        // Predicated region
        $region57: #{tpu_custom_call.1} parent=55 // pred_check
          %p1072 = pneg %p237
        $region58: #{tpu_custom_call.1} parent=55 // pred_check_branch
          %1074 = sbr.rel (%p1072) target = $region60
        $region59: #{tpu_custom_call.1} parent=55 // pred_region
          %s1076 = ssub.s32 16, 16
          %1077 = vsyncadd %s1069, %s1076
          %s1078 = smul.addr %s25, 16
          %s1079 = scalar_lea.hbm %s9, %s1078
          %s1081 = sshll.u32 %s1071, 4
          %s1082 = int_to_ptr.vmem [resolvable:$true] %s1081
          %1084 = dma.vmem_to_hbm [thread:$0]  %s1082, 16, %s1079, %s1069
        $region60: #{tpu_custom_call.1} parent=55 // pred_fallthru
          _
      $region56: #{tpu_custom_call.1} parent=5 // pred_fallthru
        _
      %p1085 = scmp.le.s32.totalorder 2, %s20
      // Predicated region
      $region61: #{tpu_custom_call.1} parent=5 // pred_check
        %p1086 = pneg %p1085
      $region62: #{tpu_custom_call.1} parent=5 // pred_check_branch
        %1088 = sbr.rel (%p1086) target = $region64
      $region63: #{tpu_custom_call.1} parent=5 // pred_region
        %s1089 = ssub.s32 %s20, 2
        // Predicated region
        $region65: #{tpu_custom_call.1} parent=63 // pred_check
          %p1090 = pneg %p243
        $region66: #{tpu_custom_call.1} parent=63 // pred_check_branch
          %1092 = sbr.rel (%p1090) target = $region68
        $region67: #{tpu_custom_call.1} parent=63 // pred_region
          %s1093 = sand.u32 %s228, 1
          %s1094 = scalar_lea.sflag [#allocation4], %s1093
          %s1095 = sand.u32 %s228, 1
          %s1096 = scalar_lea.vmem [#allocation3], %s1095
          %1097 = dma.done %s1094, 16
        $region68: #{tpu_custom_call.1} parent=63 // pred_fallthru
          _
      $region64: #{tpu_custom_call.1} parent=5 // pred_fallthru
        _
    $region6: #{tpu_custom_call.1} parent=1 // loop_footer
      %s24 = sadd.s32 1, %s20
    $region7: #{tpu_custom_call.1} parent=1 // loop_footer_branch
      %19 = sbr.rel target = $region3
    $region8: #{tpu_custom_call.1} parent=1 // loop_exit
      _
    %1098 = vsyncpa [#allocation4], 1
    %s1099 = scalar_lea.sflag [#allocation4], 1
    %1100 = vsyncpa %s1099, 1

</llo_original>
